<compile_context>
chip_gen: v7x
topology: tpu7x:2x2x1
jax: 0.10.0
libtpu: 0.0.40
codegen_flags: <defaults>
</compile_context>

<pallas_src>
import math

import jax
import jax.numpy as jnp
from jax import lax
from jax.experimental import pallas as pl
from jax.experimental.pallas import tpu as pltpu

# ----------------------------- config (gpt-tiny) -----------------------------
EMBED = 32
MLP_FACTOR = 4
HIDDEN = MLP_FACTOR * EMBED   # 128


# --------------------------------- kernel ------------------------------------
def mlp_kernel(x_ref, w1_ref, b1_ref, w2_ref, b2_ref, o_ref):
    # x: (TM, E)  w1: (E, H)  b1: (1, H)  w2: (H, Ep)  b2: (1, Ep)  o: (TM, Ep)
    x = x_ref[...].astype(jnp.float32)

    # fc1 + bias
    h = jnp.dot(x, w1_ref[...], preferred_element_type=jnp.float32) + b1_ref[...]
    # PyTorch nn.GELU() default: exact erf-based GELU (erf runs on the EUP slot).
    h = 0.5 * h * (1.0 + lax.erf(h * (1.0 / math.sqrt(2.0))))
    # fc2 + bias (output lane-padded to Ep, so this store is a full-lane vst)
    y = jnp.dot(h, w2_ref[...], preferred_element_type=jnp.float32) + b2_ref[...]

    # nn.Dropout is identity in eval mode.
    o_ref[...] = y.astype(o_ref.dtype)


# -------------------------------- wrapper -------------------------------------
def run_mlp(x, w1, b1, w2, b2, *, max_block_rows=1024):
    """x: (B, S, E).  w1: (E, H), b1: (H,), w2: (H, E), b2: (E,) -> (B, S, E)."""
    B, S, E = x.shape
    H = w1.shape[1]
    M = B * S

    # Fold batch+seq into the sublane axis: one (M, E) slab.
    x2 = x.reshape(M, E)

    # Row tile: whole slab when small; otherwise tile rows (multiple of 8 sublanes).
    tm = min(max_block_rows, M)
    tm = max(8, ((tm + 7) // 8) * 8)
    Mp = ((M + tm - 1) // tm) * tm
    if Mp != M:
        x2 = jnp.pad(x2, ((0, Mp - M), (0, 0)))

    # Lane-dense output: pad output feature dim to a multiple of 128 by
    # zero-padding w2/b2 (zeros contribute nothing; sliced back off below).
    Ep = ((E + 127) // 128) * 128
    if Ep != E:
        w2p = jnp.pad(w2, ((0, 0), (0, Ep - E)))
        b2p = jnp.pad(b2, ((0, Ep - E),))
    else:
        w2p, b2p = w2, b2

    b1_2d = b1.reshape(1, H)
    b2_2d = b2p.reshape(1, Ep)

    grid = (Mp // tm,)

    # Advisory cost estimate for the XLA scheduler.
    flops = 2 * Mp * E * H + 2 * Mp * H * Ep + 2 * Mp * (H + Ep)
    bytes_accessed = 4 * (Mp * E + E * H + H + H * Ep + Ep + Mp * Ep)
    cost = pl.CostEstimate(flops=flops, transcendentals=Mp * H,
                           bytes_accessed=bytes_accessed)

    out = pl.pallas_call(
        mlp_kernel,
        out_shape=jax.ShapeDtypeStruct((Mp, Ep), x.dtype),
        grid_spec=pltpu.PrefetchScalarGridSpec(
            num_scalar_prefetch=0,
            grid=grid,
            in_specs=[
                pl.BlockSpec((tm, E), lambda i: (i, 0)),    # activations, tiled over rows
                pl.BlockSpec((E, H), lambda i: (0, 0)),     # w1 resident in VMEM
                pl.BlockSpec((1, H), lambda i: (0, 0)),     # b1 resident
                pl.BlockSpec((H, Ep), lambda i: (0, 0)),    # w2 resident (lane-padded)
                pl.BlockSpec((1, Ep), lambda i: (0, 0)),    # b2 resident (lane-padded)
            ],
            out_specs=pl.BlockSpec((tm, Ep), lambda i: (i, 0)),
        ),
        compiler_params=pltpu.CompilerParams(
            dimension_semantics=("parallel",),
        ),
        cost_estimate=cost,
    )(x2, w1, b1_2d, w2p, b2_2d)

    return out[:M, :E].reshape(B, S, E)


# ------------------------------ parameter init --------------------------------
def init_params(key):
    std = 0.02
    k1, k2, k3, k4 = jax.random.split(key, 4)
    # nn.Linear(E, H): torch stores weight as (H, E) -> keep transposed (E, H)
    w1 = (jax.random.normal(k1, (HIDDEN, EMBED), jnp.float32) * std).T
    b1 = jax.random.normal(k2, (HIDDEN,), jnp.float32) * std
    # nn.Linear(H, E): torch stores weight as (E, H) -> keep transposed (H, E)
    w2 = (jax.random.normal(k3, (EMBED, HIDDEN), jnp.float32) * std).T
    b2 = jax.random.normal(k4, (EMBED,), jnp.float32) * std
    return w1, b1, w2, b2


def mlp_reference(x, w1, b1, w2, b2):
    h = x @ w1 + b1
    h = 0.5 * h * (1.0 + lax.erf(h / jnp.sqrt(jnp.float32(2.0))))
    return h @ w2 + b2


# ---------------------------------- main ---------------------------------------
if __name__ == "__main__":
    key = jax.random.PRNGKey(0)
    pkey, dkey = jax.random.split(key)
    w1, b1, w2, b2 = init_params(pkey)

    batch, seq = 2, 8
    x = jax.random.normal(dkey, (batch, seq, EMBED), jnp.float32)

    mlp_fn = jax.jit(run_mlp)
    y = mlp_fn(x, w1, b1, w2, b2)
    jax.block_until_ready(y)

    assert y.shape == (batch, seq, EMBED)
    assert bool(jnp.all(jnp.isfinite(y)))

    y_ref = mlp_reference(x, w1, b1, w2, b2)
    assert bool(jnp.allclose(y, y_ref, atol=1e-5, rtol=1e-5))

    print("KERNEL_OK")
</pallas_src>

<mosaic_0001>
module attributes {stable_mosaic.version = 11 : i64} {
  func.func @mlp_kernel(%arg0: i32, %arg1: memref<16x32xf32, #tpu.memory_space<vmem>>, %arg2: memref<32x128xf32, #tpu.memory_space<vmem>>, %arg3: memref<1x128xf32, #tpu.memory_space<vmem>>, %arg4: memref<128x128xf32, #tpu.memory_space<vmem>>, %arg5: memref<1x128xf32, #tpu.memory_space<vmem>>, %arg6: memref<16x128xf32, #tpu.memory_space<vmem>>) attributes {dimension_semantics = [#tpu.dimension_semantics<parallel>], iteration_bounds = array<i64: 1>, scalar_prefetch = 0 : i64, scratch_operands = 0 : i64, tpu.core_type = #tpu.core_type<tc>, window_params = [{transform_indices = @transform_0, window_bounds = array<i64: 16, 32>}, {pipeline_mode = #tpu.pipeline_mode<synchronous>, transform_indices = @transform_1, window_bounds = array<i64: 32, 128>}, {pipeline_mode = #tpu.pipeline_mode<synchronous>, transform_indices = @transform_2, window_bounds = array<i64: 1, 128>}, {pipeline_mode = #tpu.pipeline_mode<synchronous>, transform_indices = @transform_3, window_bounds = array<i64: 128, 128>}, {pipeline_mode = #tpu.pipeline_mode<synchronous>, transform_indices = @transform_4, window_bounds = array<i64: 1, 128>}, {transform_indices = @transform_5, window_bounds = array<i64: 16, 128>}]} {
    %c0 = arith.constant 0 : index
    %c0_0 = arith.constant 0 : index
    %0 = vector.load %arg1[%c0, %c0_0] : memref<16x32xf32, #tpu.memory_space<vmem>>, vector<16x32xf32>
    %c0_1 = arith.constant 0 : index
    %c0_2 = arith.constant 0 : index
    %1 = vector.load %arg2[%c0_1, %c0_2] : memref<32x128xf32, #tpu.memory_space<vmem>>, vector<32x128xf32>
    %cst = arith.constant dense<0.000000e+00> : vector<16x128xf32>
    %2 = tpu.matmul %0, %1, %cst {dimension_numbers = #tpu.dot_dimension_numbers<[1], [0], [0], [1], [0, 0, 1, 1], [], []>} : vector<16x32xf32>, vector<32x128xf32>, vector<16x128xf32> -> vector<16x128xf32>
    %c0_3 = arith.constant 0 : index
    %c0_4 = arith.constant 0 : index
    %3 = vector.load %arg3[%c0_3, %c0_4] : memref<1x128xf32, #tpu.memory_space<vmem>>, vector<1x128xf32>
    %4 = vector.broadcast %3 : vector<1x128xf32> to vector<16x128xf32>
    %5 = arith.addf %2, %4 : vector<16x128xf32>
    %cst_5 = arith.constant 5.000000e-01 : f32
    %6 = vector.broadcast %cst_5 : f32 to vector<16x128xf32>
    %7 = arith.mulf %6, %5 : vector<16x128xf32>
    %cst_6 = arith.constant 0.707106769 : f32
    %8 = vector.broadcast %cst_6 : f32 to vector<16x128xf32>
    %9 = arith.mulf %5, %8 : vector<16x128xf32>
    %10 = math.erf %9 : vector<16x128xf32>
    %cst_7 = arith.constant 1.000000e+00 : f32
    %11 = vector.broadcast %cst_7 : f32 to vector<16x128xf32>
    %12 = arith.addf %11, %10 : vector<16x128xf32>
    %13 = arith.mulf %7, %12 : vector<16x128xf32>
    %c0_8 = arith.constant 0 : index
    %c0_9 = arith.constant 0 : index
    %14 = vector.load %arg4[%c0_8, %c0_9] : memref<128x128xf32, #tpu.memory_space<vmem>>, vector<128x128xf32>
    %cst_10 = arith.constant dense<0.000000e+00> : vector<16x128xf32>
    %15 = tpu.matmul %13, %14, %cst_10 {dimension_numbers = #tpu.dot_dimension_numbers<[1], [0], [0], [1], [0, 0, 1, 1], [], []>} : vector<16x128xf32>, vector<128x128xf32>, vector<16x128xf32> -> vector<16x128xf32>
    %c0_11 = arith.constant 0 : index
    %c0_12 = arith.constant 0 : index
    %16 = vector.load %arg5[%c0_11, %c0_12] : memref<1x128xf32, #tpu.memory_space<vmem>>, vector<1x128xf32>
    %17 = vector.broadcast %16 : vector<1x128xf32> to vector<16x128xf32>
    %18 = arith.addf %15, %17 : vector<16x128xf32>
    %c0_13 = arith.constant 0 : index
    %c0_14 = arith.constant 0 : index
    %19 = vector.load %arg6[%c0_13, %c0_14] : memref<16x128xf32, #tpu.memory_space<vmem>>, vector<16x128xf32>
    tpu.vector_store %arg6[%c0_13, %c0_14], %18 {strides = array<i32>} : memref<16x128xf32, #tpu.memory_space<vmem>>, vector<16x128xf32>,
    return
  }
  func.func @transform_0(%arg0: i32) -> (i32, i32) {
    %c0_i32 = arith.constant 0 : i32
    %c0_i32_0 = arith.constant 0 : i32
    return %arg0, %c0_i32 : i32, i32
  }
  func.func @transform_1(%arg0: i32) -> (i32, i32) {
    %c0_i32 = arith.constant 0 : i32
    %c0_i32_0 = arith.constant 0 : i32
    %c0_i32_1 = arith.constant 0 : i32
    return %c0_i32, %c0_i32_0 : i32, i32
  }
  func.func @transform_2(%arg0: i32) -> (i32, i32) {
    %c0_i32 = arith.constant 0 : i32
    %c0_i32_0 = arith.constant 0 : i32
    %c0_i32_1 = arith.constant 0 : i32
    return %c0_i32, %c0_i32_0 : i32, i32
  }
  func.func @transform_3(%arg0: i32) -> (i32, i32) {
    %c0_i32 = arith.constant 0 : i32
    %c0_i32_0 = arith.constant 0 : i32
    %c0_i32_1 = arith.constant 0 : i32
    return %c0_i32, %c0_i32_0 : i32, i32
  }
  func.func @transform_4(%arg0: i32) -> (i32, i32) {
    %c0_i32 = arith.constant 0 : i32
    %c0_i32_0 = arith.constant 0 : i32
    %c0_i32_1 = arith.constant 0 : i32
    return %c0_i32, %c0_i32_0 : i32, i32
  }
  func.func @transform_5(%arg0: i32) -> (i32, i32) {
    %c0_i32 = arith.constant 0 : i32
    %c0_i32_0 = arith.constant 0 : i32
    return %arg0, %c0_i32 : i32, i32
  }
}

</mosaic_0001>

<llo_original>
// kernel: run_mlp.1
$region0: #{run_mlp.1}
  #allocation0 [shape = 'u32[]', space=smem, size = 0x4, offset = 0x4, fixed_abs, tag = 'smem constant byte address 0x4 - core index']
  #allocation1 [shape = 'u32[144,128]{1,0:T(1,128)}', space=vmem, size = 0x12000, scoped, tag = 'internal scratch']
  %s0 = inlined_call_operand.vmem [shape: f32[16,32], index: 0, kind: input, shape index: {}]
  %s1 = inlined_call_operand.vmem [shape: f32[32,128], index: 1, kind: input, shape index: {}]
  %s2 = inlined_call_operand.vmem [shape: f32[1,128], index: 2, kind: input, shape index: {}]
  %s3 = inlined_call_operand.vmem [shape: f32[128,128], index: 3, kind: input, shape index: {}]
  %s4 = inlined_call_operand.vmem [shape: f32[1,128], index: 4, kind: input, shape index: {}]
  %s5 = inlined_call_operand.vmem [shape: f32[16,128], index: 5, kind: output, shape index: {}]
  %s6 = sld [smem:[#allocation0]]
  $region30: #{run_mlp.1} parent=0
    _
  %s8 = ssub.s32 1, %s6
  %s9 = scalar_select 0, %s8, %s6
  // Predicated region
  $region2: #{run_mlp.1} parent=0 // pred_check
    _
  $region3: #{run_mlp.1} parent=0 // pred_check_branch
    %11 = sbr.rel (0) target = $region5
  $region4: #{run_mlp.1} parent=0 // pred_region
    _
  $region5: #{run_mlp.1} parent=0 // pred_fallthru
    _
  // Predicated region
  $region6: #{run_mlp.1} parent=0 // pred_check
    _
  $region7: #{run_mlp.1} parent=0 // pred_check_branch
    %13 = sbr.rel (0) target = $region9
  $region8: #{run_mlp.1} parent=0 // pred_region
    _
  $region9: #{run_mlp.1} parent=0 // pred_fallthru
    _
  // Predicated region
  $region10: #{run_mlp.1} parent=0 // pred_check
    _
  $region11: #{run_mlp.1} parent=0 // pred_check_branch
    %15 = sbr.rel (0) target = $region13
  $region12: #{run_mlp.1} parent=0 // pred_region
    _
  $region13: #{run_mlp.1} parent=0 // pred_fallthru
    _
  // Predicated region
  $region14: #{run_mlp.1} parent=0 // pred_check
    _
  $region15: #{run_mlp.1} parent=0 // pred_check_branch
    %17 = sbr.rel (0) target = $region17
  $region16: #{run_mlp.1} parent=0 // pred_region
    _
  $region17: #{run_mlp.1} parent=0 // pred_fallthru
    _
  // Predicated region
  $region18: #{run_mlp.1} parent=0 // pred_check
    _
  $region19: #{run_mlp.1} parent=0 // pred_check_branch
    %19 = sbr.rel (0) target = $region21
  $region20: #{run_mlp.1} parent=0 // pred_region
    _
  $region21: #{run_mlp.1} parent=0 // pred_fallthru
    _
  %v20 = vld [vmem:[%s0] sm:$0xff]
  %v21 = vld [vmem:[%s0 + $0x8] sm:$0xff]
  %v22 = vld [vmem:[%s1] sm:$0xff]
  %v23 = vld [vmem:[%s1 + $0x8] sm:$0xff]
  %v24 = vld [vmem:[%s1 + $0x10] sm:$0xff]
  %v25 = vld [vmem:[%s1 + $0x18] sm:$0xff]
  %v26 = vld [vmem:[%s2] sm:$0x1]
  %v28 = vlaneseq
  %v29 = vshrl.u32 %v28, 7
  %v30 = vsub.s32 0, %v29
  %v31 = vrot.slane %v26, %v30
  %vm33 = vcmask 261120
  %v35 = vsel %vm33, %v20, 0
  %v38 = vsel %vm33, %v21, 0
  %40 = vmatprep.subr.mxu0 0.0
  %41 = vmatpush1.msra.mxu0 %v22
  %42 = vmatprep.subr.mxu0 0.0
  %43 = vmatpush1.msra.mxu0 %v23
  %44 = vmatprep.subr.mxu0 0.0
  %45 = vmatpush1.msra.mxu0 %v24
  %46 = vmatprep.subr.mxu0 0.0
  %47 = vmatpush1.msra.mxu0 %v25
  %48 = vmatprep.subr.mxu0 0.0
  %49 = vmatpush1.msra.mxu0 0.0
  %50 = vmatprep.subr.mxu0 0.0
  %51 = vmatpush1.msra.mxu0 0.0
  %52 = vmatprep.subr.mxu0 0.0
  %53 = vmatpush1.msra.mxu0 0.0
  %54 = vmatprep.subr.mxu0 0.0
  %55 = vmatpush1.msra.mxu0 0.0
  %56 = vmatprep.subr.mxu0 0.0
  %57 = vmatpush1.msra.mxu0 0.0
  %58 = vmatprep.subr.mxu0 0.0
  %59 = vmatpush1.msra.mxu0 0.0
  %60 = vmatprep.subr.mxu0 0.0
  %61 = vmatpush1.msra.mxu0 0.0
  %62 = vmatprep.subr.mxu0 0.0
  %63 = vmatpush1.msra.mxu0 0.0
  %64 = vmatprep.subr.mxu0 0.0
  %65 = vmatpush1.msra.mxu0 0.0
  %66 = vmatprep.subr.mxu0 0.0
  %67 = vmatpush1.msra.mxu0 0.0
  %68 = vmatprep.subr.mxu0 0.0
  %69 = vmatpush1.msra.mxu0 0.0
  %70 = vmatprep.subr.mxu0 0.0
  %71 = vmatpush1.msra.mxu0 0.0
  %72 = vmatprep.subr.mxu0 0.0
  %73 = vmatpush1.msra.mxu0 0.0
  %74 = vmatprep.subr.mxu0 0.0
  %75 = vmatpush1.msra.mxu0 0.0
  %76 = vmatprep.subr.mxu0 0.0
  %77 = vmatpush1.msra.mxu0 0.0
  %78 = vmatprep.subr.mxu0 0.0
  %79 = vmatpush1.msra.mxu0 0.0
  %80 = vmatprep.subr.mxu0 0.0
  %81 = vmatpush1.msra.mxu0 0.0
  %82 = vmatprep.subr.mxu0 0.0
  %83 = vmatpush1.msra.mxu0 0.0
  %84 = vmatprep.subr.mxu0 0.0
  %85 = vmatpush1.msra.mxu0 0.0
  %86 = vmatprep.subr.mxu0 0.0
  %87 = vmatpush1.msra.mxu0 0.0
  %88 = vmatprep.subr.mxu0 0.0
  %89 = vmatpush1.msra.mxu0 0.0
  %90 = vmatprep.subr.mxu0 0.0
  %91 = vmatpush1.msra.mxu0 0.0
  %92 = vmatprep.subr.mxu0 0.0
  %93 = vmatpush1.msra.mxu0 0.0
  %94 = vmatprep.subr.mxu0 0.0
  %95 = vmatpush1.msra.mxu0 0.0
  %96 = vmatprep.subr.mxu0 0.0
  %97 = vmatpush1.msra.mxu0 0.0
  %98 = vmatprep.subr.mxu0 0.0
  %99 = vmatpush1.msra.mxu0 0.0
  %100 = vmatprep.subr.mxu0 0.0
  %101 = vmatpush1.msra.mxu0 0.0
  %102 = vmatprep.subr.mxu0 0.0
  %103 = vmatpush1.msra.mxu0 0.0
  %104 = vmatprep.mubr.f32.mxu0 0.0
  %105 = vmatmul.mubr.f32.gmra.mrb[0].mxu0 %v35
  %v106 = vpop.f32.mrb[0].mxu0
  %v107 = vadd.f32 %v31, %v106
  %v108 = vpop.f32.mrb[0].mxu0
  %109 = vmatprep.mubr.f32.mxu0 0.0
  %110 = vmatmul.mubr.f32.gmra.mrb[0].mxu0 %v38
  %v111 = vpop.f32.mrb[0].mxu0
  %v112 = vadd.f32 %v31, %v111
  %v113 = vpop.f32.mrb[0].mxu0
  %114 = vdwg.mxu0
  %v115 = vmul.f32 %v107, 0.5
  %v116 = vmul.f32 %v112, 0.5
  %v117 = vmul.f32 %v107, 0.70710677
  %v118 = vmul.f32 %v112, 0.70710677
  %v119 = verf.f32.pop %v117
  %v120 = verf.f32.pop %v118
  %v121 = vadd.f32 %v119, 1.0
  %v122 = vadd.f32 %v120, 1.0
  %v123 = vmul.f32 %v115, %v121
  %v124 = vmul.f32 %v116, %v122
  %v125 = vld [vmem:[%s3] sm:$0xff]
  %v126 = vld [vmem:[%s3 + $0x8] sm:$0xff]
  %v127 = vld [vmem:[%s3 + $0x10] sm:$0xff]
  %v128 = vld [vmem:[%s3 + $0x18] sm:$0xff]
  %v129 = vld [vmem:[%s3 + $0x20] sm:$0xff]
  %v130 = vld [vmem:[%s3 + $0x28] sm:$0xff]
  %v131 = vld [vmem:[%s3 + $0x30] sm:$0xff]
  %v132 = vld [vmem:[%s3 + $0x38] sm:$0xff]
  %v133 = vld [vmem:[%s3 + $0x40] sm:$0xff]
  %v134 = vld [vmem:[%s3 + $0x48] sm:$0xff]
  %v135 = vld [vmem:[%s3 + $0x50] sm:$0xff]
  %v136 = vld [vmem:[%s3 + $0x58] sm:$0xff]
  %v137 = vld [vmem:[%s3 + $0x60] sm:$0xff]
  %v138 = vld [vmem:[%s3 + $0x68] sm:$0xff]
  %v139 = vld [vmem:[%s3 + $0x70] sm:$0xff]
  %v140 = vld [vmem:[%s3 + $0x78] sm:$0xff]
  %v141 = vld [vmem:[%s4] sm:$0x1]
  %v143 = vlaneseq
  %v144 = vshrl.u32 %v143, 7
  %v145 = vsub.s32 0, %v144
  %v146 = vrot.slane %v141, %v145
  %148 = vmatprep.subr.mxu0 0.0
  %149 = vmatpush1.msra.mxu0 %v125
  %150 = vmatprep.subr.mxu0 0.0
  %151 = vmatpush1.msra.mxu0 %v126
  %152 = vmatprep.subr.mxu0 0.0
  %153 = vmatpush1.msra.mxu0 %v127
  %154 = vmatprep.subr.mxu0 0.0
  %155 = vmatpush1.msra.mxu0 %v128
  %156 = vmatprep.subr.mxu0 0.0
  %157 = vmatpush1.msra.mxu0 %v129
  %158 = vmatprep.subr.mxu0 0.0
  %159 = vmatpush1.msra.mxu0 %v130
  %160 = vmatprep.subr.mxu0 0.0
  %161 = vmatpush1.msra.mxu0 %v131
  %162 = vmatprep.subr.mxu0 0.0
  %163 = vmatpush1.msra.mxu0 %v132
  %164 = vmatprep.subr.mxu0 0.0
  %165 = vmatpush1.msra.mxu0 %v133
  %166 = vmatprep.subr.mxu0 0.0
  %167 = vmatpush1.msra.mxu0 %v134
  %168 = vmatprep.subr.mxu0 0.0
  %169 = vmatpush1.msra.mxu0 %v135
  %170 = vmatprep.subr.mxu0 0.0
  %171 = vmatpush1.msra.mxu0 %v136
  %172 = vmatprep.subr.mxu0 0.0
  %173 = vmatpush1.msra.mxu0 %v137
  %174 = vmatprep.subr.mxu0 0.0
  %175 = vmatpush1.msra.mxu0 %v138
  %176 = vmatprep.subr.mxu0 0.0
  %177 = vmatpush1.msra.mxu0 %v139
  %178 = vmatprep.subr.mxu0 0.0
  %179 = vmatpush1.msra.mxu0 %v140
  %180 = vmatprep.subr.mxu0 0.0
  %181 = vmatpush1.msra.mxu0 0.0
  %182 = vmatprep.subr.mxu0 0.0
  %183 = vmatpush1.msra.mxu0 0.0
  %184 = vmatprep.subr.mxu0 0.0
  %185 = vmatpush1.msra.mxu0 0.0
  %186 = vmatprep.subr.mxu0 0.0
  %187 = vmatpush1.msra.mxu0 0.0
  %188 = vmatprep.subr.mxu0 0.0
  %189 = vmatpush1.msra.mxu0 0.0
  %190 = vmatprep.subr.mxu0 0.0
  %191 = vmatpush1.msra.mxu0 0.0
  %192 = vmatprep.subr.mxu0 0.0
  %193 = vmatpush1.msra.mxu0 0.0
  %194 = vmatprep.subr.mxu0 0.0
  %195 = vmatpush1.msra.mxu0 0.0
  %196 = vmatprep.subr.mxu0 0.0
  %197 = vmatpush1.msra.mxu0 0.0
  %198 = vmatprep.subr.mxu0 0.0
  %199 = vmatpush1.msra.mxu0 0.0
  %200 = vmatprep.subr.mxu0 0.0
  %201 = vmatpush1.msra.mxu0 0.0
  %202 = vmatprep.subr.mxu0 0.0
  %203 = vmatpush1.msra.mxu0 0.0
  %204 = vmatprep.subr.mxu0 0.0
  %205 = vmatpush1.msra.mxu0 0.0
  %206 = vmatprep.subr.mxu0 0.0
  %207 = vmatpush1.msra.mxu0 0.0
  %208 = vmatprep.subr.mxu0 0.0
  %209 = vmatpush1.msra.mxu0 0.0
  %210 = vmatprep.subr.mxu0 0.0
  %211 = vmatpush1.msra.mxu0 0.0
  %212 = vmatprep.mubr.f32.mxu0 0.0
  %213 = vmatmul.mubr.f32.gmra.mrb[0].mxu0 %v123
  %v214 = vpop.f32.mrb[0].mxu0
  %v215 = vadd.f32 %v146, %v214
  %v216 = vpop.f32.mrb[0].mxu0
  %217 = vmatprep.mubr.f32.mxu0 0.0
  %218 = vmatmul.mubr.f32.gmra.mrb[0].mxu0 %v124
  %v219 = vpop.f32.mrb[0].mxu0
  %v220 = vadd.f32 %v146, %v219
  %v221 = vpop.f32.mrb[0].mxu0
  %222 = vdwg.mxu0
  %223 = vst [vmem:[%s5] sm:$0xff] %v215
  %224 = vst [vmem:[%s5 + $0x8] sm:$0xff] %v220
  // Predicated region
  $region22: #{run_mlp.1} parent=0 // pred_check
    _
  $region23: #{run_mlp.1} parent=0 // pred_check_branch
    %226 = sbr.rel (0) target = $region25
  $region24: #{run_mlp.1} parent=0 // pred_region
    _
  $region25: #{run_mlp.1} parent=0 // pred_fallthru
    _
  // Predicated region
  $region26: #{run_mlp.1} parent=0 // pred_check
    _
  $region27: #{run_mlp.1} parent=0 // pred_check_branch
    %228 = sbr.rel (0) target = $region29
  $region28: #{run_mlp.1} parent=0 // pred_region
    _
  $region29: #{run_mlp.1} parent=0 // pred_fallthru
    _

</llo_original>
